<compile_context>
chip_gen: v6e
topology: v6e:2x2x1
jax: 0.10.0
libtpu: 0.0.40
codegen_flags: <defaults>
</compile_context>

<pallas_src>
import functools

import jax
import jax.numpy as jnp
from jax.experimental import pallas as pl
from jax.experimental.pallas import tpu as pltpu

_LANE = 128      # lane width of a vreg
_SUBLANE = 8     # f32 sublanes of a vreg
_MAX_BATCH_TILE = 1024   # rows per grid step; ~0.5 MiB/activation tile at 128 wide
_SPLIT_BATCH = 256       # above this, force >=2 grid steps (v7x has 2 TensorCores)
_MAX_RESIDENT_WEIGHT_BYTES = 24 * 1024 * 1024  # stay under the 32 MiB scoped-VMEM default


def _round_up(x: int, m: int) -> int:
    return ((x + m - 1) // m) * m


def _cdiv(a: int, b: int) -> int:
    return -(-a // b)


def _fused_mlp_kernel(x_ref, *refs, n_layers: int, bf16_matmul: bool):
    """Fused MLP: y = Ln(...ReLU(L2(ReLU(L1(x))))...).

    refs = (w1, b1, w2, b2, ..., wn, bn, o_ref). Intermediate activations stay
    on-chip (VMEM/vregs); they never touch HBM between layers.
    """
    o_ref = refs[-1]
    wb = refs[:-1]
    h = x_ref[...].astype(jnp.float32)
    for li in range(n_layers):
        w = wb[2 * li][...]
        b = wb[2 * li + 1][...].astype(jnp.float32)
        if bf16_matmul:
            # bf16 MXU inputs, f32 accumulation + f32 bias add.
            h = jnp.dot(h.astype(jnp.bfloat16), w.astype(jnp.bfloat16),
                        preferred_element_type=jnp.float32) + b
        else:
            h = jnp.dot(h, w.astype(jnp.float32),
                        preferred_element_type=jnp.float32) + b
        if li < n_layers - 1:          # output layer has no activation
            h = jnp.maximum(h, 0.0)
    o_ref[...] = h.astype(o_ref.dtype)


def _resident_spec(shape):
    """BlockSpec for a tensor whose block index never changes across the grid
    (weights / biases): single-buffer it so it isn't pointlessly double-buffered."""
    idx_map = lambda i: (0, 0)
    try:
        return pl.BlockSpec(shape, idx_map, pipeline_mode=pl.Buffered(1))
    except (TypeError, AttributeError):   # older JAX without pipeline_mode
        return pl.BlockSpec(shape, idx_map)


def pad_fcq_params(params):
    """Zero-pad weights/biases to lane-aligned shapes ONCE (init / param-update
    time, NOT per forward call). Zero padding is mathematically transparent.

    params: list of (w, b) with w: [in, out] (PyTorch W.T), b: [1, out], f32.
    The first layer keeps its natural (unpadded) input dim so `state` can be
    passed to the kernel without any per-call padding.
    Returns (padded_params, output_dim).
    """
    padded = []
    for li, (w, b) in enumerate(params):
        in_d = w.shape[0] if li == 0 else _round_up(w.shape[0], _LANE)
        out_d = _round_up(w.shape[1], _LANE)
        pw = jnp.zeros((in_d, out_d), jnp.float32).at[: w.shape[0], : w.shape[1]].set(w)
        pb = jnp.zeros((1, out_d), jnp.float32).at[:, : b.shape[1]].set(b)
        padded.append((pw, pb))
    return padded, params[-1][0].shape[1]


@functools.partial(jax.jit, static_argnames=("output_dim", "bf16_matmul"))
def fcq_forward(padded_params, state, *, output_dim: int, bf16_matmul: bool = False):
    """Forward pass of FCQ as a single fused Pallas kernel.

    padded_params: output of pad_fcq_params (pre-padded, done once).
    state:         [B, input_dim] observations.
    Returns [B, output_dim] Q-values (f32).
    """
    x = jnp.asarray(state, dtype=jnp.float32)
    B, input_dim = x.shape
    n_layers = len(padded_params)
    assert padded_params[0][0].shape[0] == input_dim, "params/state dim mismatch"

    # Padded (lane-aligned) layer widths; first entry is the natural input dim.
    pdims = [input_dim] + [w.shape[1] for (w, _) in padded_params]

    weight_bytes = sum(w.size * w.dtype.itemsize + b.size * b.dtype.itemsize
                       for (w, b) in padded_params)
    if weight_bytes > _MAX_RESIDENT_WEIGHT_BYTES:
        # TODO(synk): for large hidden dims, K-tile the weights with a reduction
        # ("arbitrary") grid axis + pl.when accumulator init instead of keeping
        # the whole MLP resident in VMEM (matters first on v7x: 64 MiB physical).
        raise ValueError("FCQ weights too large to keep resident in VMEM; "
                         "add a K-tiled reduction grid axis.")

    # Batch tiling:
    #  * small batch  -> one block covering the whole batch (no padding at all);
    #  * large batch  -> >=2 grid steps so the "parallel" axis can shard across
    #    both TensorCores on v7x, with at most a ragged last block (Pallas masks
    #    OOB reads/writes), never the old up-to-2x padded work.
    if B <= _SPLIT_BATCH:
        b_tile = B
    else:
        b_tile = min(_round_up(_cdiv(B, 2), _SUBLANE), _MAX_BATCH_TILE)
    grid = _cdiv(B, b_tile)

    in_specs = [pl.BlockSpec((b_tile, input_dim), lambda i: (i, 0))]
    flat_args = []
    for (w, b) in padded_params:
        in_specs.append(_resident_spec(w.shape))
        in_specs.append(_resident_spec(b.shape))
        flat_args.extend((w, b))
    out_specs = pl.BlockSpec((b_tile, pdims[-1]), lambda i: (i, 0))

    flops = 2 * B * sum(pdims[i] * pdims[i + 1] for i in range(n_layers))
    bytes_accessed = x.size * 4 + weight_bytes + B * pdims[-1] * 4

    kernel = functools.partial(_fused_mlp_kernel, n_layers=n_layers,
                               bf16_matmul=bf16_matmul)
    out_pad = pl.pallas_call(
        kernel,
        out_shape=jax.ShapeDtypeStruct((B, pdims[-1]), jnp.float32),
        grid=(grid,),
        in_specs=in_specs,
        out_specs=out_specs,
        compiler_params=pltpu.CompilerParams(
            dimension_semantics=("parallel",)),   # batch axis shards across TCs
        cost_estimate=pl.CostEstimate(flops=flops, transcendentals=0,
                                      bytes_accessed=bytes_accessed),
    )(x, *flat_args)

    # Only the output lanes are padded; slice the real Q-values back out.
    return out_pad[:, :output_dim]


def init_fcq_params(key, input_dim: int, output_dim: int, hidden_dims):
    """Deterministic init mimicking PyTorch nn.Linear defaults
    (uniform(-1/sqrt(fan_in), 1/sqrt(fan_in))). Weights stored as [in, out]."""
    dims = [input_dim] + list(hidden_dims) + [output_dim]
    params = []
    for i in range(len(dims) - 1):
        fan_in, fan_out = dims[i], dims[i + 1]
        key, kw, kb = jax.random.split(key, 3)
        bound = 1.0 / jnp.sqrt(float(fan_in))
        w = jax.random.uniform(kw, (fan_in, fan_out), jnp.float32, -bound, bound)
        b = jax.random.uniform(kb, (1, fan_out), jnp.float32, -bound, bound)
        params.append((w, b))
    return params


if __name__ == "__main__":
    # Small shapes consistent with the module:
    # FCQ(input_dim=4, output_dim=8, hidden_dims=[32, 32]), batch of 2 observations.
    input_dim, output_dim, hidden_dims = 4, 8, [32, 32]
    batch = 2

    key = jax.random.PRNGKey(0)
    key, kx = jax.random.split(key)
    params = init_fcq_params(key, input_dim, output_dim, hidden_dims)
    padded_params, out_dim = pad_fcq_params(params)   # one-time padding (init time)
    state = jax.random.normal(kx, (batch, input_dim), jnp.float32)

    q_values = jax.block_until_ready(
        fcq_forward(padded_params, state, output_dim=out_dim))

    # Pure-JAX reference check (same math, no Pallas).
    x_ref = state
    for li, (w, b) in enumerate(params):
        x_ref = x_ref @ w + b
        if li < len(params) - 1:
            x_ref = jnp.maximum(x_ref, 0.0)

    assert q_values.shape == (batch, output_dim)
    assert jnp.allclose(q_values, x_ref, atol=1e-5, rtol=1e-5)

    print("KERNEL_OK")
</pallas_src>

<mosaic_0001>
module attributes {stable_mosaic.version = 11 : i64} {
  func.func @_fused_mlp_kernel(%arg0: i32, %arg1: memref<2x4xf32, #tpu.memory_space<vmem>>, %arg2: memref<4x128xf32, #tpu.memory_space<vmem>>, %arg3: memref<1x128xf32, #tpu.memory_space<vmem>>, %arg4: memref<128x128xf32, #tpu.memory_space<vmem>>, %arg5: memref<1x128xf32, #tpu.memory_space<vmem>>, %arg6: memref<128x128xf32, #tpu.memory_space<vmem>>, %arg7: memref<1x128xf32, #tpu.memory_space<vmem>>, %arg8: memref<2x128xf32, #tpu.memory_space<vmem>>) attributes {dimension_semantics = [#tpu.dimension_semantics<parallel>], iteration_bounds = array<i64: 1>, scalar_prefetch = 0 : i64, scratch_operands = 0 : i64, tpu.core_type = #tpu.core_type<tc>, window_params = [{transform_indices = @transform_0, window_bounds = array<i64: 2, 4>}, {pipeline_mode = #tpu.pipeline_mode<synchronous>, transform_indices = @transform_1, window_bounds = array<i64: 4, 128>}, {pipeline_mode = #tpu.pipeline_mode<synchronous>, transform_indices = @transform_2, window_bounds = array<i64: 1, 128>}, {pipeline_mode = #tpu.pipeline_mode<synchronous>, transform_indices = @transform_3, window_bounds = array<i64: 128, 128>}, {pipeline_mode = #tpu.pipeline_mode<synchronous>, transform_indices = @transform_4, window_bounds = array<i64: 1, 128>}, {pipeline_mode = #tpu.pipeline_mode<synchronous>, transform_indices = @transform_5, window_bounds = array<i64: 128, 128>}, {pipeline_mode = #tpu.pipeline_mode<synchronous>, transform_indices = @transform_6, window_bounds = array<i64: 1, 128>}, {transform_indices = @transform_7, window_bounds = array<i64: 2, 128>}]} {
    %c0 = arith.constant 0 : index
    %c0_0 = arith.constant 0 : index
    %0 = vector.load %arg1[%c0, %c0_0] : memref<2x4xf32, #tpu.memory_space<vmem>>, vector<2x4xf32>
    %c0_1 = arith.constant 0 : index
    %c0_2 = arith.constant 0 : index
    %1 = vector.load %arg2[%c0_1, %c0_2] : memref<4x128xf32, #tpu.memory_space<vmem>>, vector<4x128xf32>
    %c0_3 = arith.constant 0 : index
    %c0_4 = arith.constant 0 : index
    %2 = vector.load %arg3[%c0_3, %c0_4] : memref<1x128xf32, #tpu.memory_space<vmem>>, vector<1x128xf32>
    %cst = arith.constant dense<0.000000e+00> : vector<2x128xf32>
    %3 = tpu.matmul %0, %1, %cst {dimension_numbers = #tpu.dot_dimension_numbers<[1], [0], [0], [1], [0, 0, 1, 1], [], []>} : vector<2x4xf32>, vector<4x128xf32>, vector<2x128xf32> -> vector<2x128xf32>
    %4 = vector.broadcast %2 : vector<1x128xf32> to vector<2x128xf32>
    %5 = arith.addf %3, %4 : vector<2x128xf32>
    %cst_5 = arith.constant 0.000000e+00 : f32
    %6 = vector.broadcast %cst_5 : f32 to vector<2x128xf32>
    %7 = arith.maximumf %5, %6 : vector<2x128xf32>
    %c0_6 = arith.constant 0 : index
    %c0_7 = arith.constant 0 : index
    %8 = vector.load %arg4[%c0_6, %c0_7] : memref<128x128xf32, #tpu.memory_space<vmem>>, vector<128x128xf32>
    %c0_8 = arith.constant 0 : index
    %c0_9 = arith.constant 0 : index
    %9 = vector.load %arg5[%c0_8, %c0_9] : memref<1x128xf32, #tpu.memory_space<vmem>>, vector<1x128xf32>
    %cst_10 = arith.constant dense<0.000000e+00> : vector<2x128xf32>
    %10 = tpu.matmul %7, %8, %cst_10 {dimension_numbers = #tpu.dot_dimension_numbers<[1], [0], [0], [1], [0, 0, 1, 1], [], []>} : vector<2x128xf32>, vector<128x128xf32>, vector<2x128xf32> -> vector<2x128xf32>
    %11 = vector.broadcast %9 : vector<1x128xf32> to vector<2x128xf32>
    %12 = arith.addf %10, %11 : vector<2x128xf32>
    %cst_11 = arith.constant 0.000000e+00 : f32
    %13 = vector.broadcast %cst_11 : f32 to vector<2x128xf32>
    %14 = arith.maximumf %12, %13 : vector<2x128xf32>
    %c0_12 = arith.constant 0 : index
    %c0_13 = arith.constant 0 : index
    %15 = vector.load %arg6[%c0_12, %c0_13] : memref<128x128xf32, #tpu.memory_space<vmem>>, vector<128x128xf32>
    %c0_14 = arith.constant 0 : index
    %c0_15 = arith.constant 0 : index
    %16 = vector.load %arg7[%c0_14, %c0_15] : memref<1x128xf32, #tpu.memory_space<vmem>>, vector<1x128xf32>
    %cst_16 = arith.constant dense<0.000000e+00> : vector<2x128xf32>
    %17 = tpu.matmul %14, %15, %cst_16 {dimension_numbers = #tpu.dot_dimension_numbers<[1], [0], [0], [1], [0, 0, 1, 1], [], []>} : vector<2x128xf32>, vector<128x128xf32>, vector<2x128xf32> -> vector<2x128xf32>
    %18 = vector.broadcast %16 : vector<1x128xf32> to vector<2x128xf32>
    %19 = arith.addf %17, %18 : vector<2x128xf32>
    %c0_17 = arith.constant 0 : index
    %c0_18 = arith.constant 0 : index
    %20 = vector.load %arg8[%c0_17, %c0_18] : memref<2x128xf32, #tpu.memory_space<vmem>>, vector<2x128xf32>
    tpu.vector_store %arg8[%c0_17, %c0_18], %19 {strides = array<i32>} : memref<2x128xf32, #tpu.memory_space<vmem>>, vector<2x128xf32>,
    return
  }
  func.func @transform_0(%arg0: i32) -> (i32, i32) {
    %c0_i32 = arith.constant 0 : i32
    %c0_i32_0 = arith.constant 0 : i32
    return %arg0, %c0_i32 : i32, i32
  }
  func.func @transform_1(%arg0: i32) -> (i32, i32) {
    %c0_i32 = arith.constant 0 : i32
    %c0_i32_0 = arith.constant 0 : i32
    %c0_i32_1 = arith.constant 0 : i32
    return %c0_i32, %c0_i32_0 : i32, i32
  }
  func.func @transform_2(%arg0: i32) -> (i32, i32) {
    %c0_i32 = arith.constant 0 : i32
    %c0_i32_0 = arith.constant 0 : i32
    %c0_i32_1 = arith.constant 0 : i32
    return %c0_i32, %c0_i32_0 : i32, i32
  }
  func.func @transform_3(%arg0: i32) -> (i32, i32) {
    %c0_i32 = arith.constant 0 : i32
    %c0_i32_0 = arith.constant 0 : i32
    %c0_i32_1 = arith.constant 0 : i32
    return %c0_i32, %c0_i32_0 : i32, i32
  }
  func.func @transform_4(%arg0: i32) -> (i32, i32) {
    %c0_i32 = arith.constant 0 : i32
    %c0_i32_0 = arith.constant 0 : i32
    %c0_i32_1 = arith.constant 0 : i32
    return %c0_i32, %c0_i32_0 : i32, i32
  }
  func.func @transform_5(%arg0: i32) -> (i32, i32) {
    %c0_i32 = arith.constant 0 : i32
    %c0_i32_0 = arith.constant 0 : i32
    %c0_i32_1 = arith.constant 0 : i32
    return %c0_i32, %c0_i32_0 : i32, i32
  }
  func.func @transform_6(%arg0: i32) -> (i32, i32) {
    %c0_i32 = arith.constant 0 : i32
    %c0_i32_0 = arith.constant 0 : i32
    %c0_i32_1 = arith.constant 0 : i32
    return %c0_i32, %c0_i32_0 : i32, i32
  }
  func.func @transform_7(%arg0: i32) -> (i32, i32) {
    %c0_i32 = arith.constant 0 : i32
    %c0_i32_0 = arith.constant 0 : i32
    return %arg0, %c0_i32 : i32, i32
  }
}

</mosaic_0001>

<llo_original>
// kernel: fcq_forward.1
$region0: #{fcq_forward.1}
  #allocation0 [shape = 'u32[]', space=smem, size = 0x4, offset = 0x4, fixed_abs, tag = 'smem constant byte address 0x4 - core index']
  #allocation1 [shape = 'u32[144,128]{1,0:T(1,128)}', space=vmem, size = 0x12000, scoped, tag = 'internal scratch']
  %s0 = inlined_call_operand.vmem [shape: f32[2,4], index: 0, kind: input, shape index: {}]
  %s1 = inlined_call_operand.hbm [shape: f32[4,128], index: 1, kind: input, shape index: {}]
  %s2 = inlined_call_operand.vmem [shape: f32[1,128], index: 2, kind: input, shape index: {}]
  %s3 = inlined_call_operand.hbm [shape: f32[128,128], index: 3, kind: input, shape index: {}]
  %s4 = inlined_call_operand.vmem [shape: f32[1,128], index: 4, kind: input, shape index: {}]
  %s5 = inlined_call_operand.hbm [shape: f32[128,128], index: 5, kind: input, shape index: {}]
  %s6 = inlined_call_operand.vmem [shape: f32[1,128], index: 6, kind: input, shape index: {}]
  %s7 = inlined_call_operand.hbm [shape: f32[2,128], index: 7, kind: output, shape index: {}]
  %s8 = sld [smem:[#allocation0]]
  $region50: #{fcq_forward.1} parent=0
    _
  %s10 = ssub.s32 1, %s8
  %s11 = scalar_select 0, %s10, %s8
  $region1: #{fcq_forward.1} parent=0
    #allocation2 [shape = 'u8[2048]{0}', space=vmem, size = 0x800, scoped, tag = 'input window, operand 1, single buffered']
    #allocation3 [shape = 's32[1]{0}', space=sflag, size = 0x4, scoped, tag = 'scoped memory for fcq_forward.1']
    #allocation4 [shape = 's32[1]{0}', space=sflag, size = 0x4, scoped, tag = 'scoped memory for fcq_forward.1']
    #allocation5 [shape = 'u8[65536]{0}', space=vmem, size = 0x10000, scoped, tag = 'input window, operand 3, single buffered']
    #allocation6 [shape = 's32[1]{0}', space=sflag, size = 0x4, scoped, tag = 'scoped memory for fcq_forward.1']
    #allocation7 [shape = 'u8[65536]{0}', space=vmem, size = 0x10000, scoped, tag = 'input window, operand 5, single buffered']
    #allocation8 [shape = 'u8[1024]{0}', space=vmem, size = 0x400, scoped, tag = 'output window, operand 0, single buffered']
    %12 = vsyncpa [#allocation3], 0
    %13 = vsyncpa [#allocation6], 0
    %14 = vsyncpa [#allocation4], 0
    // Predicated region
    $region2: #{fcq_forward.1} parent=1 // pred_check
      _
    $region3: #{fcq_forward.1} parent=1 // pred_check_branch
      %16 = sbr.rel (0) target = $region5
    $region4: #{fcq_forward.1} parent=1 // pred_region
      _
    $region5: #{fcq_forward.1} parent=1 // pred_fallthru
      _
    // Predicated region
    $region6: #{fcq_forward.1} parent=1 // pred_check
      _
    $region7: #{fcq_forward.1} parent=1 // pred_check_branch
      %18 = sbr.rel (0) target = $region9
    $region8: #{fcq_forward.1} parent=1 // pred_region
      %s20 = ssub.s32 64, 64
      %21 = vsyncadd [#allocation3], %s20
      %s23 = sshll.u32 [#allocation2], 4
      %s24 = int_to_ptr.vmem [resolvable:$true] %s23
      %26 = dma.hbm_to_vmem [thread:$0]  %s1, 64, %s24, [#allocation3]
    $region9: #{fcq_forward.1} parent=1 // pred_fallthru
      _
    // Predicated region
    $region10: #{fcq_forward.1} parent=1 // pred_check
      _
    $region11: #{fcq_forward.1} parent=1 // pred_check_branch
      %28 = sbr.rel (0) target = $region13
    $region12: #{fcq_forward.1} parent=1 // pred_region
      _
    $region13: #{fcq_forward.1} parent=1 // pred_fallthru
      _
    // Predicated region
    $region14: #{fcq_forward.1} parent=1 // pred_check
      _
    $region15: #{fcq_forward.1} parent=1 // pred_check_branch
      %30 = sbr.rel (0) target = $region17
    $region16: #{fcq_forward.1} parent=1 // pred_region
      %s32 = ssub.s32 2048, 2048
      %33 = vsyncadd [#allocation6], %s32
      %s34 = sshll.u32 [#allocation5], 4
      %s35 = int_to_ptr.vmem [resolvable:$true] %s34
      %40 = dma.hbm_to_vmem [thread:$0]  %s3, 2048, %s35, [#allocation6], 128, 128, 8
    $region17: #{fcq_forward.1} parent=1 // pred_fallthru
      _
    // Predicated region
    $region18: #{fcq_forward.1} parent=1 // pred_check
      _
    $region19: #{fcq_forward.1} parent=1 // pred_check_branch
      %42 = sbr.rel (0) target = $region21
    $region20: #{fcq_forward.1} parent=1 // pred_region
      _
    $region21: #{fcq_forward.1} parent=1 // pred_fallthru
      _
    // Predicated region
    $region22: #{fcq_forward.1} parent=1 // pred_check
      _
    $region23: #{fcq_forward.1} parent=1 // pred_check_branch
      %44 = sbr.rel (0) target = $region25
    $region24: #{fcq_forward.1} parent=1 // pred_region
      %s46 = ssub.s32 2048, 2048
      %47 = vsyncadd [#allocation6], %s46
      %s48 = sshll.u32 [#allocation7], 4
      %s49 = int_to_ptr.vmem [resolvable:$true] %s48
      %54 = dma.hbm_to_vmem [thread:$0]  %s5, 2048, %s49, [#allocation6], 128, 128, 8
    $region25: #{fcq_forward.1} parent=1 // pred_fallthru
      _
    // Predicated region
    $region26: #{fcq_forward.1} parent=1 // pred_check
      _
    $region27: #{fcq_forward.1} parent=1 // pred_check_branch
      %56 = sbr.rel (0) target = $region29
    $region28: #{fcq_forward.1} parent=1 // pred_region
      _
    $region29: #{fcq_forward.1} parent=1 // pred_fallthru
      _
    // Predicated region
    $region30: #{fcq_forward.1} parent=1 // pred_check
      _
    $region31: #{fcq_forward.1} parent=1 // pred_check_branch
      %58 = sbr.rel (0) target = $region33
    $region32: #{fcq_forward.1} parent=1 // pred_region
      %59 = dma.done [#allocation3], 64
    $region33: #{fcq_forward.1} parent=1 // pred_fallthru
      _
    // Predicated region
    $region34: #{fcq_forward.1} parent=1 // pred_check
      _
    $region35: #{fcq_forward.1} parent=1 // pred_check_branch
      %61 = sbr.rel (0) target = $region37
    $region36: #{fcq_forward.1} parent=1 // pred_region
      %62 = dma.done [#allocation6], 2048
    $region37: #{fcq_forward.1} parent=1 // pred_fallthru
      _
    // Predicated region
    $region38: #{fcq_forward.1} parent=1 // pred_check
      _
    $region39: #{fcq_forward.1} parent=1 // pred_check_branch
      %64 = sbr.rel (0) target = $region41
    $region40: #{fcq_forward.1} parent=1 // pred_region
      %65 = dma.done [#allocation6], 2048
    $region41: #{fcq_forward.1} parent=1 // pred_fallthru
      _
    %v66 = vld [vmem:[%s0] sm:$0x3]
    %v67 = vld [vmem:[#allocation2] sm:$0xf]
    %v68 = vld [vmem:[%s2] sm:$0x1]
    %v70 = vlaneseq
    %v71 = vshrl.u32 %v70, 7
    %v72 = vsub.s32 0, %v71
    %v73 = vrot.slane %v68, %v72
    %vm75 = vcmask 31744
    %v77 = vsel %vm75, %v66, 0
    %vm79 = vcmask 1043456
    %v81 = vsel %vm79, %v67, 0
    %83 = vmatprep.subr.mxu0 0.0
    %84 = vmatpush1.msra.mxu0 0.0
    %85 = vmatprep.subr.mxu0 0.0
    %86 = vmatpush1.msra.mxu0 0.0
    %87 = vmatprep.subr.mxu0 0.0
    %88 = vmatpush1.msra.mxu0 0.0
    %89 = vmatprep.subr.mxu0 0.0
    %90 = vmatpush1.msra.mxu0 0.0
    %91 = vmatprep.subr.mxu0 0.0
    %92 = vmatpush1.msra.mxu0 0.0
    %93 = vmatprep.subr.mxu0 0.0
    %94 = vmatpush1.msra.mxu0 0.0
    %95 = vmatprep.subr.mxu0 0.0
    %96 = vmatpush1.msra.mxu0 0.0
    %97 = vmatprep.subr.mxu0 0.0
    %98 = vmatpush1.msra.mxu0 0.0
    %99 = vmatprep.subr.mxu0 0.0
    %100 = vmatpush1.msra.mxu0 0.0
    %101 = vmatprep.subr.mxu0 0.0
    %102 = vmatpush1.msra.mxu0 0.0
    %103 = vmatprep.subr.mxu0 0.0
    %104 = vmatpush1.msra.mxu0 0.0
    %105 = vmatprep.subr.mxu0 0.0
    %106 = vmatpush1.msra.mxu0 0.0
    %107 = vmatprep.subr.mxu0 0.0
    %108 = vmatpush1.msra.mxu0 0.0
    %109 = vmatprep.subr.mxu0 0.0
    %110 = vmatpush1.msra.mxu0 0.0
    %111 = vmatprep.subr.mxu0 0.0
    %112 = vmatpush1.msra.mxu0 0.0
    %113 = vmatprep.subr.mxu0 0.0
    %114 = vmatpush1.msra.mxu0 %v81
    %115 = vmatprep.subr.mxu0 0.0
    %116 = vmatpush2.msra.mxu0 0.0
    %117 = vmatprep.subr.mxu0 0.0
    %118 = vmatpush2.msra.mxu0 0.0
    %119 = vmatprep.subr.mxu0 0.0
    %120 = vmatpush2.msra.mxu0 0.0
    %121 = vmatprep.subr.mxu0 0.0
    %122 = vmatpush2.msra.mxu0 0.0
    %123 = vmatprep.subr.mxu0 0.0
    %124 = vmatpush2.msra.mxu0 0.0
    %125 = vmatprep.subr.mxu0 0.0
    %126 = vmatpush2.msra.mxu0 0.0
    %127 = vmatprep.subr.mxu0 0.0
    %128 = vmatpush2.msra.mxu0 0.0
    %129 = vmatprep.subr.mxu0 0.0
    %130 = vmatpush2.msra.mxu0 0.0
    %131 = vmatprep.subr.mxu0 0.0
    %132 = vmatpush2.msra.mxu0 0.0
    %133 = vmatprep.subr.mxu0 0.0
    %134 = vmatpush2.msra.mxu0 0.0
    %135 = vmatprep.subr.mxu0 0.0
    %136 = vmatpush2.msra.mxu0 0.0
    %137 = vmatprep.subr.mxu0 0.0
    %138 = vmatpush2.msra.mxu0 0.0
    %139 = vmatprep.subr.mxu0 0.0
    %140 = vmatpush2.msra.mxu0 0.0
    %141 = vmatprep.subr.mxu0 0.0
    %142 = vmatpush2.msra.mxu0 0.0
    %143 = vmatprep.subr.mxu0 0.0
    %144 = vmatpush2.msra.mxu0 0.0
    %145 = vmatprep.subr.mxu0 0.0
    %146 = vmatpush2.msra.mxu0 0.0
    %147 = vmatprep.mubr.f32.mxu0 0.0
    %148 = vmatmul.mubr.f32.gmra.mxu0 %v77
    %v149 = vpop.f32.mrf.mxu0
    %v150 = vadd.f32 %v73, %v149
    %v151 = vpop.f32.mrf.mxu0
    %152 = vdwg.mxu0
    %v153 = vmax.f32 %v150, 0.0
    %v154 = vld [vmem:[#allocation5] sm:$0xff]
    %v155 = vld [vmem:[#allocation5 + $0x8] sm:$0xff]
    %v156 = vld [vmem:[#allocation5 + $0x10] sm:$0xff]
    %v157 = vld [vmem:[#allocation5 + $0x18] sm:$0xff]
    %v158 = vld [vmem:[#allocation5 + $0x20] sm:$0xff]
    %v159 = vld [vmem:[#allocation5 + $0x28] sm:$0xff]
    %v160 = vld [vmem:[#allocation5 + $0x30] sm:$0xff]
    %v161 = vld [vmem:[#allocation5 + $0x38] sm:$0xff]
    %v162 = vld [vmem:[#allocation5 + $0x40] sm:$0xff]
    %v163 = vld [vmem:[#allocation5 + $0x48] sm:$0xff]
    %v164 = vld [vmem:[#allocation5 + $0x50] sm:$0xff]
    %v165 = vld [vmem:[#allocation5 + $0x58] sm:$0xff]
    %v166 = vld [vmem:[#allocation5 + $0x60] sm:$0xff]
    %v167 = vld [vmem:[#allocation5 + $0x68] sm:$0xff]
    %v168 = vld [vmem:[#allocation5 + $0x70] sm:$0xff]
    %v169 = vld [vmem:[#allocation5 + $0x78] sm:$0xff]
    %v170 = vld [vmem:[%s4] sm:$0x1]
    %v172 = vlaneseq
    %v173 = vshrl.u32 %v172, 7
    %v174 = vsub.s32 0, %v173
    %v175 = vrot.slane %v170, %v174
    %177 = vmatprep.subr.mxu0 0.0
    %178 = vmatpush1.msra.mxu0 %v169
    %179 = vmatprep.subr.mxu0 0.0
    %180 = vmatpush1.msra.mxu0 %v168
    %181 = vmatprep.subr.mxu0 0.0
    %182 = vmatpush1.msra.mxu0 %v167
    %183 = vmatprep.subr.mxu0 0.0
    %184 = vmatpush1.msra.mxu0 %v166
    %185 = vmatprep.subr.mxu0 0.0
    %186 = vmatpush1.msra.mxu0 %v165
    %187 = vmatprep.subr.mxu0 0.0
    %188 = vmatpush1.msra.mxu0 %v164
    %189 = vmatprep.subr.mxu0 0.0
    %190 = vmatpush1.msra.mxu0 %v163
    %191 = vmatprep.subr.mxu0 0.0
    %192 = vmatpush1.msra.mxu0 %v162
    %193 = vmatprep.subr.mxu0 0.0
    %194 = vmatpush1.msra.mxu0 %v161
    %195 = vmatprep.subr.mxu0 0.0
    %196 = vmatpush1.msra.mxu0 %v160
    %197 = vmatprep.subr.mxu0 0.0
    %198 = vmatpush1.msra.mxu0 %v159
    %199 = vmatprep.subr.mxu0 0.0
    %200 = vmatpush1.msra.mxu0 %v158
    %201 = vmatprep.subr.mxu0 0.0
    %202 = vmatpush1.msra.mxu0 %v157
    %203 = vmatprep.subr.mxu0 0.0
    %204 = vmatpush1.msra.mxu0 %v156
    %205 = vmatprep.subr.mxu0 0.0
    %206 = vmatpush1.msra.mxu0 %v155
    %207 = vmatprep.subr.mxu0 0.0
    %208 = vmatpush1.msra.mxu0 %v154
    %209 = vmatprep.subr.mxu0 0.0
    %210 = vmatpush2.msra.mxu0 0.0
    %211 = vmatprep.subr.mxu0 0.0
    %212 = vmatpush2.msra.mxu0 0.0
    %213 = vmatprep.subr.mxu0 0.0
    %214 = vmatpush2.msra.mxu0 0.0
    %215 = vmatprep.subr.mxu0 0.0
    %216 = vmatpush2.msra.mxu0 0.0
    %217 = vmatprep.subr.mxu0 0.0
    %218 = vmatpush2.msra.mxu0 0.0
    %219 = vmatprep.subr.mxu0 0.0
    %220 = vmatpush2.msra.mxu0 0.0
    %221 = vmatprep.subr.mxu0 0.0
    %222 = vmatpush2.msra.mxu0 0.0
    %223 = vmatprep.subr.mxu0 0.0
    %224 = vmatpush2.msra.mxu0 0.0
    %225 = vmatprep.subr.mxu0 0.0
    %226 = vmatpush2.msra.mxu0 0.0
    %227 = vmatprep.subr.mxu0 0.0
    %228 = vmatpush2.msra.mxu0 0.0
    %229 = vmatprep.subr.mxu0 0.0
    %230 = vmatpush2.msra.mxu0 0.0
    %231 = vmatprep.subr.mxu0 0.0
    %232 = vmatpush2.msra.mxu0 0.0
    %233 = vmatprep.subr.mxu0 0.0
    %234 = vmatpush2.msra.mxu0 0.0
    %235 = vmatprep.subr.mxu0 0.0
    %236 = vmatpush2.msra.mxu0 0.0
    %237 = vmatprep.subr.mxu0 0.0
    %238 = vmatpush2.msra.mxu0 0.0
    %239 = vmatprep.subr.mxu0 0.0
    %240 = vmatpush2.msra.mxu0 0.0
    %241 = vmatprep.mubr.f32.mxu0 0.0
    %242 = vmatmul.mubr.f32.gmra.mxu0 %v153
    %v243 = vpop.f32.mrf.mxu0
    %v244 = vadd.f32 %v175, %v243
    %v245 = vpop.f32.mrf.mxu0
    %246 = vdwg.mxu0
    %v247 = vmax.f32 %v244, 0.0
    %v248 = vld [vmem:[#allocation7] sm:$0xff]
    %v249 = vld [vmem:[#allocation7 + $0x8] sm:$0xff]
    %v250 = vld [vmem:[#allocation7 + $0x10] sm:$0xff]
    %v251 = vld [vmem:[#allocation7 + $0x18] sm:$0xff]
    %v252 = vld [vmem:[#allocation7 + $0x20] sm:$0xff]
    %v253 = vld [vmem:[#allocation7 + $0x28] sm:$0xff]
    %v254 = vld [vmem:[#allocation7 + $0x30] sm:$0xff]
    %v255 = vld [vmem:[#allocation7 + $0x38] sm:$0xff]
    %v256 = vld [vmem:[#allocation7 + $0x40] sm:$0xff]
    %v257 = vld [vmem:[#allocation7 + $0x48] sm:$0xff]
    %v258 = vld [vmem:[#allocation7 + $0x50] sm:$0xff]
    %v259 = vld [vmem:[#allocation7 + $0x58] sm:$0xff]
    %v260 = vld [vmem:[#allocation7 + $0x60] sm:$0xff]
    %v261 = vld [vmem:[#allocation7 + $0x68] sm:$0xff]
    %v262 = vld [vmem:[#allocation7 + $0x70] sm:$0xff]
    %v263 = vld [vmem:[#allocation7 + $0x78] sm:$0xff]
    %v264 = vld [vmem:[%s6] sm:$0x1]
    %v266 = vlaneseq
    %v267 = vshrl.u32 %v266, 7
    %v268 = vsub.s32 0, %v267
    %v269 = vrot.slane %v264, %v268
    %271 = vmatprep.subr.mxu0 0.0
    %272 = vmatpush1.msra.mxu0 %v263
    %273 = vmatprep.subr.mxu0 0.0
    %274 = vmatpush1.msra.mxu0 %v262
    %275 = vmatprep.subr.mxu0 0.0
    %276 = vmatpush1.msra.mxu0 %v261
    %277 = vmatprep.subr.mxu0 0.0
    %278 = vmatpush1.msra.mxu0 %v260
    %279 = vmatprep.subr.mxu0 0.0
    %280 = vmatpush1.msra.mxu0 %v259
    %281 = vmatprep.subr.mxu0 0.0
    %282 = vmatpush1.msra.mxu0 %v258
    %283 = vmatprep.subr.mxu0 0.0
    %284 = vmatpush1.msra.mxu0 %v257
    %285 = vmatprep.subr.mxu0 0.0
    %286 = vmatpush1.msra.mxu0 %v256
    %287 = vmatprep.subr.mxu0 0.0
    %288 = vmatpush1.msra.mxu0 %v255
    %289 = vmatprep.subr.mxu0 0.0
    %290 = vmatpush1.msra.mxu0 %v254
    %291 = vmatprep.subr.mxu0 0.0
    %292 = vmatpush1.msra.mxu0 %v253
    %293 = vmatprep.subr.mxu0 0.0
    %294 = vmatpush1.msra.mxu0 %v252
    %295 = vmatprep.subr.mxu0 0.0
    %296 = vmatpush1.msra.mxu0 %v251
    %297 = vmatprep.subr.mxu0 0.0
    %298 = vmatpush1.msra.mxu0 %v250
    %299 = vmatprep.subr.mxu0 0.0
    %300 = vmatpush1.msra.mxu0 %v249
    %301 = vmatprep.subr.mxu0 0.0
    %302 = vmatpush1.msra.mxu0 %v248
    %303 = vmatprep.subr.mxu0 0.0
    %304 = vmatpush2.msra.mxu0 0.0
    %305 = vmatprep.subr.mxu0 0.0
    %306 = vmatpush2.msra.mxu0 0.0
    %307 = vmatprep.subr.mxu0 0.0
    %308 = vmatpush2.msra.mxu0 0.0
    %309 = vmatprep.subr.mxu0 0.0
    %310 = vmatpush2.msra.mxu0 0.0
    %311 = vmatprep.subr.mxu0 0.0
    %312 = vmatpush2.msra.mxu0 0.0
    %313 = vmatprep.subr.mxu0 0.0
    %314 = vmatpush2.msra.mxu0 0.0
    %315 = vmatprep.subr.mxu0 0.0
    %316 = vmatpush2.msra.mxu0 0.0
    %317 = vmatprep.subr.mxu0 0.0
    %318 = vmatpush2.msra.mxu0 0.0
    %319 = vmatprep.subr.mxu0 0.0
    %320 = vmatpush2.msra.mxu0 0.0
    %321 = vmatprep.subr.mxu0 0.0
    %322 = vmatpush2.msra.mxu0 0.0
    %323 = vmatprep.subr.mxu0 0.0
    %324 = vmatpush2.msra.mxu0 0.0
    %325 = vmatprep.subr.mxu0 0.0
    %326 = vmatpush2.msra.mxu0 0.0
    %327 = vmatprep.subr.mxu0 0.0
    %328 = vmatpush2.msra.mxu0 0.0
    %329 = vmatprep.subr.mxu0 0.0
    %330 = vmatpush2.msra.mxu0 0.0
    %331 = vmatprep.subr.mxu0 0.0
    %332 = vmatpush2.msra.mxu0 0.0
    %333 = vmatprep.subr.mxu0 0.0
    %334 = vmatpush2.msra.mxu0 0.0
    %335 = vmatprep.mubr.f32.mxu0 0.0
    %336 = vmatmul.mubr.f32.gmra.mxu0 %v247
    %v337 = vpop.f32.mrf.mxu0
    %v338 = vadd.f32 %v269, %v337
    %v339 = vpop.f32.mrf.mxu0
    %340 = vdwg.mxu0
    %341 = vst [vmem:[#allocation8] sm:$0x3] %v338
    // Predicated region
    $region42: #{fcq_forward.1} parent=1 // pred_check
      _
    $region43: #{fcq_forward.1} parent=1 // pred_check_branch
      %343 = sbr.rel (0) target = $region45
    $region44: #{fcq_forward.1} parent=1 // pred_region
      %s345 = ssub.s32 32, 32
      %346 = vsyncadd [#allocation4], %s345
      %s348 = sshll.u32 [#allocation8], 4
      %s349 = int_to_ptr.vmem [resolvable:$true] %s348
      %351 = dma.vmem_to_hbm [thread:$0]  %s349, 32, %s7, [#allocation4]
    $region45: #{fcq_forward.1} parent=1 // pred_fallthru
      _
    // Predicated region
    $region46: #{fcq_forward.1} parent=1 // pred_check
      _
    $region47: #{fcq_forward.1} parent=1 // pred_check_branch
      %353 = sbr.rel (0) target = $region49
    $region48: #{fcq_forward.1} parent=1 // pred_region
      %354 = dma.done [#allocation4], 32
    $region49: #{fcq_forward.1} parent=1 // pred_fallthru
      _
    %355 = vsyncpa [#allocation3], 1
    %356 = vsyncpa [#allocation6], 1
    %357 = vsyncpa [#allocation4], 1

</llo_original>
